<compile_context>
chip_gen: v5e
topology: v5e:2x2
jax: 0.10.0
libtpu: 0.0.40
codegen_flags: <defaults>
</compile_context>

<pallas_src>
import functools

import jax
import jax.numpy as jnp
from jax.experimental import pallas as pl
from jax.experimental.pallas import tpu as pltpu

# ---------------- model config (small, consistent with a PINN FCN) -----------
N_INPUT = 2
N_OUTPUT = 3
N_HIDDEN = 32
N_LAYERS = 3          # input layer + (N_LAYERS-1) hidden layers + output layer
BATCH = 256


def _fcn_kernel(x_ref, w_in_ref, b_in_ref, w_h_ref, b_h_ref, w_out_ref,
                b_out_ref, o_ref, *, n_hidden_layers, n_input):
    """Whole MLP forward for one batch tile, fused in VMEM.

    Transposed layout (batch on lanes, features on sublanes):
      x_ref:     (N_INPUT, tile_b)
      w_in_ref:  (N_HIDDEN, N_INPUT)          b_in_ref:  (N_HIDDEN, 1)
      w_h_ref:   (L-1, N_HIDDEN, N_HIDDEN)    b_h_ref:   (L-1, N_HIDDEN, 1)
      w_out_ref: (N_OUTPUT, N_HIDDEN)         b_out_ref: (N_OUTPUT, 1)
      o_ref:     (N_OUTPUT, tile_b)           # lane-dense, unpadded
    """
    x = x_ref[...]                                  # (n_input, tile_b)
    w_in = w_in_ref[...]                            # (n_hidden, n_input)

    # Input layer as VPU broadcast-FMAs: K = N_INPUT is tiny (2), so a matmul
    # would use <1% of the MXU array and pay result-FIFO latency. Two
    # vmul+vadd on the VPU are cheaper. Bias broadcast is hoisted out of the
    # (static, unrolled) loop.
    acc = jnp.broadcast_to(b_in_ref[...], (w_in.shape[0], x.shape[1]))
    for k in range(n_input):                        # static unroll (n_input=2)
        acc = acc + w_in[:, k:k + 1] * x[k:k + 1, :]
    h = jnp.tanh(acc)                               # (n_hidden, tile_b)

    # Hidden layers on the MXU: (32,32) @ (32, tile_b). Batch on the MXU N
    # dimension -> full-width column tiles. Static unroll over layer count.
    for l in range(n_hidden_layers):
        h = jnp.tanh(
            jnp.dot(w_h_ref[l], h, preferred_element_type=jnp.float32)
            + b_h_ref[l]
        )

    # Output layer (no activation): (3,32) @ (32, tile_b) -> (3, tile_b).
    # 3 rows x tile_b lanes -> lane-dense store at the true output width.
    o_ref[...] = (
        jnp.dot(w_out_ref[...], h, preferred_element_type=jnp.float32)
        + b_out_ref[...]
    ).astype(o_ref.dtype)


def fcn_forward(x, params, *, tile_b=None):
    """Pallas FCN forward. x: [B, N_INPUT] float32 -> [B, N_OUTPUT] float32."""
    w_in, b_in, w_h, b_h, w_out, b_out = params
    B, n_in = x.shape
    n_hidden = w_in.shape[0]
    n_out = w_out.shape[0]
    n_hidden_layers = w_h.shape[0]

    if tile_b is None:
        # Overhead-dominated at small B: take the whole batch in one grid step
        # (grid=(1,)) -- best on single-TensorCore v5e/v6e. For large PINN
        # batches use 1024-8192; with this transposed layout each live
        # (n_hidden, tile_b) f32 activation costs only tile_b*128 B, and the
        # x/out tiles ~tile_b*32 B each (x2 double-buffered), so even
        # tile_b=8192 stays ~1-2 MiB of VMEM -- comfortably under the 16 MiB
        # (v5e) / 32 MiB (v6e/v7x) scoped defaults.
        tile_b = min(B, 2048)
    assert B % tile_b == 0, "batch must be a multiple of the batch tile"
    # TODO(synk): arbitrary (non-multiple) collocation counts need wrapper-side
    # padding of x to the next tile multiple.
    assert tile_b == B or tile_b % 128 == 0, "tile_b must be lane-aligned (128)"

    # Cheap wrapper-side transposes (B x 2 in, B x 3 out).
    x_t = x.T                                       # (n_in, B)

    kernel = functools.partial(
        _fcn_kernel, n_hidden_layers=n_hidden_layers, n_input=n_in)

    flops = 2 * B * (n_in * n_hidden
                     + n_hidden_layers * n_hidden * n_hidden
                     + n_hidden * n_out)
    transcendentals = B * n_hidden * (1 + n_hidden_layers)
    param_bytes = sum(int(p.size) * p.dtype.itemsize for p in params)
    bytes_accessed = 4 * B * (n_in + n_out) + param_bytes

    grid = (B // tile_b,)
    out_t = pl.pallas_call(
        kernel,
        out_shape=jax.ShapeDtypeStruct((n_out, B), jnp.float32),
        grid_spec=pltpu.PrefetchScalarGridSpec(
            num_scalar_prefetch=0,
            grid=grid,
            in_specs=[
                # x: batch tiled along lanes.
                pl.BlockSpec((n_in, tile_b), lambda i: (0, i)),
                # Weights/biases: full-array blocks pinned to block index 0 ->
                # resident in VMEM across grid steps, no re-DMA (~10 KB total).
                pl.BlockSpec(w_in.shape, lambda i: (0, 0)),
                pl.BlockSpec(b_in.shape, lambda i: (0, 0)),
                pl.BlockSpec(w_h.shape, lambda i: (0, 0, 0)),
                pl.BlockSpec(b_h.shape, lambda i: (0, 0, 0)),
                pl.BlockSpec(w_out.shape, lambda i: (0, 0)),
                pl.BlockSpec(b_out.shape, lambda i: (0, 0)),
            ],
            out_specs=pl.BlockSpec((n_out, tile_b), lambda i: (0, i)),
        ),
        compiler_params=pltpu.CompilerParams(
            # Batch tiles are independent. On v7x, if a trace shows one
            # TensorCore idle, switch this axis to pltpu.CORE_PARALLEL and use
            # a grid that is a multiple of 2.
            dimension_semantics=("parallel",),
        ),
        cost_estimate=pl.CostEstimate(
            flops=flops,
            transcendentals=transcendentals,
            bytes_accessed=bytes_accessed,
        ),
    )(x_t, w_in, b_in, w_h, b_h, w_out, b_out)

    return out_t.T                                  # (B, n_out)


def init_params(key):
    """Deterministic PyTorch-style uniform(-1/sqrt(fan_in), 1/sqrt(fan_in)) init.

    One-time parameter prep: weights stored in native nn.Linear orientation
    [out, in], biases as [out, 1] -- exactly what the kernel consumes, so the
    forward pass never re-packs/pads parameters.
    """
    ks = jax.random.split(key, 6)

    def lin(kw, kb, fan_in, fan_out):
        bound = 1.0 / jnp.sqrt(fan_in)
        w = jax.random.uniform(kw, (fan_out, fan_in), jnp.float32, -bound, bound)
        b = jax.random.uniform(kb, (fan_out, 1), jnp.float32, -bound, bound)
        return w, b

    w_in, b_in = lin(ks[0], ks[1], N_INPUT, N_HIDDEN)

    n_hidden_layers = N_LAYERS - 1
    kh = jax.random.split(ks[2], 2 * max(n_hidden_layers, 1))
    w_h_list, b_h_list = [], []
    for l in range(n_hidden_layers):
        w, b = lin(kh[2 * l], kh[2 * l + 1], N_HIDDEN, N_HIDDEN)
        w_h_list.append(w)
        b_h_list.append(b.reshape(1, N_HIDDEN, 1))
    w_h = jnp.stack(w_h_list, axis=0)                      # (L-1, H, H)
    b_h = jnp.concatenate(b_h_list, axis=0)                # (L-1, H, 1)

    w_out, b_out = lin(ks[3], ks[4], N_HIDDEN, N_OUTPUT)
    return w_in, b_in, w_h, b_h, w_out, b_out


def fcn_forward_ref(x, params):
    """Plain-JAX reference (PyTorch y = x @ W.T + b semantics)."""
    w_in, b_in, w_h, b_h, w_out, b_out = params
    h = jnp.tanh(x @ w_in.T + b_in[:, 0])
    for l in range(w_h.shape[0]):
        h = jnp.tanh(h @ w_h[l].T + b_h[l, :, 0])
    return h @ w_out.T + b_out[:, 0]


if __name__ == "__main__":
    key = jax.random.PRNGKey(0)
    k_x, k_p = jax.random.split(key)

    x = jax.random.normal(k_x, (BATCH, N_INPUT), jnp.float32)
    params = init_params(k_p)

    out = fcn_forward(x, params)
    out = jax.block_until_ready(out)

    ref = fcn_forward_ref(x, params)
    assert out.shape == (BATCH, N_OUTPUT)
    assert jnp.allclose(out, ref, atol=1e-5, rtol=1e-5), "mismatch vs JAX reference"

    print("KERNEL_OK")
</pallas_src>

<mosaic_0001>
module attributes {stable_mosaic.version = 11 : i64} {
  func.func @_fcn_kernel(%arg0: i32, %arg1: memref<2x256xf32, #tpu.memory_space<vmem>>, %arg2: memref<32x2xf32, #tpu.memory_space<vmem>>, %arg3: memref<32x1xf32, #tpu.memory_space<vmem>>, %arg4: memref<2x32x32xf32, #tpu.memory_space<vmem>>, %arg5: memref<2x32x1xf32, #tpu.memory_space<vmem>>, %arg6: memref<3x32xf32, #tpu.memory_space<vmem>>, %arg7: memref<3x1xf32, #tpu.memory_space<vmem>>, %arg8: memref<3x256xf32, #tpu.memory_space<vmem>>) attributes {dimension_semantics = [#tpu.dimension_semantics<parallel>], iteration_bounds = array<i64: 1>, scalar_prefetch = 0 : i64, scratch_operands = 0 : i64, tpu.core_type = #tpu.core_type<tc>, window_params = [{transform_indices = @transform_0, window_bounds = array<i64: 2, 256>}, {pipeline_mode = #tpu.pipeline_mode<synchronous>, transform_indices = @transform_1, window_bounds = array<i64: 32, 2>}, {pipeline_mode = #tpu.pipeline_mode<synchronous>, transform_indices = @transform_2, window_bounds = array<i64: 32, 1>}, {pipeline_mode = #tpu.pipeline_mode<synchronous>, transform_indices = @transform_3, window_bounds = array<i64: 2, 32, 32>}, {pipeline_mode = #tpu.pipeline_mode<synchronous>, transform_indices = @transform_4, window_bounds = array<i64: 2, 32, 1>}, {pipeline_mode = #tpu.pipeline_mode<synchronous>, transform_indices = @transform_5, window_bounds = array<i64: 3, 32>}, {pipeline_mode = #tpu.pipeline_mode<synchronous>, transform_indices = @transform_6, window_bounds = array<i64: 3, 1>}, {transform_indices = @transform_7, window_bounds = array<i64: 3, 256>}]} {
    %c0 = arith.constant 0 : index
    %c0_0 = arith.constant 0 : index
    %0 = vector.load %arg1[%c0, %c0_0] : memref<2x256xf32, #tpu.memory_space<vmem>>, vector<2x256xf32>
    %c0_1 = arith.constant 0 : index
    %c0_2 = arith.constant 0 : index
    %1 = vector.load %arg2[%c0_1, %c0_2] : memref<32x2xf32, #tpu.memory_space<vmem>>, vector<32x2xf32>
    %c0_3 = arith.constant 0 : index
    %c0_4 = arith.constant 0 : index
    %2 = vector.load %arg3[%c0_3, %c0_4] : memref<32x1xf32, #tpu.memory_space<vmem>>, vector<32x1xf32>
    %3 = vector.shape_cast %2 : vector<32x1xf32> to vector<32x1xf32>
    %4 = vector.broadcast %3 : vector<32x1xf32> to vector<32x256xf32>
    %5 = vector.extract_strided_slice %1 {offsets = [0, 0], sizes = [32, 1], strides = [1, 1]} : vector<32x2xf32> to vector<32x1xf32>
    %6 = vector.extract_strided_slice %0 {offsets = [0, 0], sizes = [1, 256], strides = [1, 1]} : vector<2x256xf32> to vector<1x256xf32>
    %7 = vector.broadcast %5 : vector<32x1xf32> to vector<32x256xf32>
    %8 = vector.broadcast %6 : vector<1x256xf32> to vector<32x256xf32>
    %9 = arith.mulf %7, %8 : vector<32x256xf32>
    %10 = arith.addf %4, %9 : vector<32x256xf32>
    %11 = vector.extract_strided_slice %1 {offsets = [0, 1], sizes = [32, 1], strides = [1, 1]} : vector<32x2xf32> to vector<32x1xf32>
    %12 = vector.extract_strided_slice %0 {offsets = [1, 0], sizes = [1, 256], strides = [1, 1]} : vector<2x256xf32> to vector<1x256xf32>
    %13 = vector.broadcast %11 : vector<32x1xf32> to vector<32x256xf32>
    %14 = vector.broadcast %12 : vector<1x256xf32> to vector<32x256xf32>
    %15 = arith.mulf %13, %14 : vector<32x256xf32>
    %16 = arith.addf %10, %15 : vector<32x256xf32>
    %17 = math.tanh %16 : vector<32x256xf32>
    %c0_5 = arith.constant 0 : index
    %c0_6 = arith.constant 0 : index
    %c0_7 = arith.constant 0 : index
    %18 = vector.load %arg4[%c0_5, %c0_6, %c0_7] : memref<2x32x32xf32, #tpu.memory_space<vmem>>, vector<1x32x32xf32>
    %19 = vector.shape_cast %18 : vector<1x32x32xf32> to vector<32x32xf32>
    %cst = arith.constant dense<0.000000e+00> : vector<32x256xf32>
    %20 = tpu.matmul %19, %17, %cst {dimension_numbers = #tpu.dot_dimension_numbers<[1], [0], [0], [1], [0, 0, 1, 1], [], []>} : vector<32x32xf32>, vector<32x256xf32>, vector<32x256xf32> -> vector<32x256xf32>
    %c0_8 = arith.constant 0 : index
    %c0_9 = arith.constant 0 : index
    %c0_10 = arith.constant 0 : index
    %21 = vector.load %arg5[%c0_8, %c0_9, %c0_10] : memref<2x32x1xf32, #tpu.memory_space<vmem>>, vector<1x32x1xf32>
    %22 = vector.shape_cast %21 : vector<1x32x1xf32> to vector<32x1xf32>
    %23 = vector.broadcast %22 : vector<32x1xf32> to vector<32x256xf32>
    %24 = arith.addf %20, %23 : vector<32x256xf32>
    %25 = math.tanh %24 : vector<32x256xf32>
    %c1 = arith.constant 1 : index
    %c0_11 = arith.constant 0 : index
    %c0_12 = arith.constant 0 : index
    %26 = vector.load %arg4[%c1, %c0_11, %c0_12] : memref<2x32x32xf32, #tpu.memory_space<vmem>>, vector<1x32x32xf32>
    %27 = vector.shape_cast %26 : vector<1x32x32xf32> to vector<32x32xf32>
    %cst_13 = arith.constant dense<0.000000e+00> : vector<32x256xf32>
    %28 = tpu.matmul %27, %25, %cst_13 {dimension_numbers = #tpu.dot_dimension_numbers<[1], [0], [0], [1], [0, 0, 1, 1], [], []>} : vector<32x32xf32>, vector<32x256xf32>, vector<32x256xf32> -> vector<32x256xf32>
    %c1_14 = arith.constant 1 : index
    %c0_15 = arith.constant 0 : index
    %c0_16 = arith.constant 0 : index
    %29 = vector.load %arg5[%c1_14, %c0_15, %c0_16] : memref<2x32x1xf32, #tpu.memory_space<vmem>>, vector<1x32x1xf32>
    %30 = vector.shape_cast %29 : vector<1x32x1xf32> to vector<32x1xf32>
    %31 = vector.broadcast %30 : vector<32x1xf32> to vector<32x256xf32>
    %32 = arith.addf %28, %31 : vector<32x256xf32>
    %33 = math.tanh %32 : vector<32x256xf32>
    %c0_17 = arith.constant 0 : index
    %c0_18 = arith.constant 0 : index
    %34 = vector.load %arg6[%c0_17, %c0_18] : memref<3x32xf32, #tpu.memory_space<vmem>>, vector<3x32xf32>
    %cst_19 = arith.constant dense<0.000000e+00> : vector<3x256xf32>
    %35 = tpu.matmul %34, %33, %cst_19 {dimension_numbers = #tpu.dot_dimension_numbers<[1], [0], [0], [1], [0, 0, 1, 1], [], []>} : vector<3x32xf32>, vector<32x256xf32>, vector<3x256xf32> -> vector<3x256xf32>
    %c0_20 = arith.constant 0 : index
    %c0_21 = arith.constant 0 : index
    %36 = vector.load %arg7[%c0_20, %c0_21] : memref<3x1xf32, #tpu.memory_space<vmem>>, vector<3x1xf32>
    %37 = vector.broadcast %36 : vector<3x1xf32> to vector<3x256xf32>
    %38 = arith.addf %35, %37 : vector<3x256xf32>
    %c0_22 = arith.constant 0 : index
    %c0_23 = arith.constant 0 : index
    %39 = vector.load %arg8[%c0_22, %c0_23] : memref<3x256xf32, #tpu.memory_space<vmem>>, vector<3x256xf32>
    tpu.vector_store %arg8[%c0_22, %c0_23], %38 {strides = array<i32>} : memref<3x256xf32, #tpu.memory_space<vmem>>, vector<3x256xf32>,
    return
  }
  func.func @transform_0(%arg0: i32) -> (i32, i32) {
    %c0_i32 = arith.constant 0 : i32
    %c0_i32_0 = arith.constant 0 : i32
    return %c0_i32, %arg0 : i32, i32
  }
  func.func @transform_1(%arg0: i32) -> (i32, i32) {
    %c0_i32 = arith.constant 0 : i32
    %c0_i32_0 = arith.constant 0 : i32
    %c0_i32_1 = arith.constant 0 : i32
    return %c0_i32, %c0_i32_0 : i32, i32
  }
  func.func @transform_2(%arg0: i32) -> (i32, i32) {
    %c0_i32 = arith.constant 0 : i32
    %c0_i32_0 = arith.constant 0 : i32
    %c0_i32_1 = arith.constant 0 : i32
    return %c0_i32, %c0_i32_0 : i32, i32
  }
  func.func @transform_3(%arg0: i32) -> (i32, i32, i32) {
    %c0_i32 = arith.constant 0 : i32
    %c0_i32_0 = arith.constant 0 : i32
    %c0_i32_1 = arith.constant 0 : i32
    %c0_i32_2 = arith.constant 0 : i32
    return %c0_i32, %c0_i32_0, %c0_i32_1 : i32, i32, i32
  }
  func.func @transform_4(%arg0: i32) -> (i32, i32, i32) {
    %c0_i32 = arith.constant 0 : i32
    %c0_i32_0 = arith.constant 0 : i32
    %c0_i32_1 = arith.constant 0 : i32
    %c0_i32_2 = arith.constant 0 : i32
    return %c0_i32, %c0_i32_0, %c0_i32_1 : i32, i32, i32
  }
  func.func @transform_5(%arg0: i32) -> (i32, i32) {
    %c0_i32 = arith.constant 0 : i32
    %c0_i32_0 = arith.constant 0 : i32
    %c0_i32_1 = arith.constant 0 : i32
    return %c0_i32, %c0_i32_0 : i32, i32
  }
  func.func @transform_6(%arg0: i32) -> (i32, i32) {
    %c0_i32 = arith.constant 0 : i32
    %c0_i32_0 = arith.constant 0 : i32
    %c0_i32_1 = arith.constant 0 : i32
    return %c0_i32, %c0_i32_0 : i32, i32
  }
  func.func @transform_7(%arg0: i32) -> (i32, i32) {
    %c0_i32 = arith.constant 0 : i32
    %c0_i32_0 = arith.constant 0 : i32
    return %c0_i32, %arg0 : i32, i32
  }
}

</mosaic_0001>

<llo_original>
// kernel: tpu_custom_call.1
$region0: #{tpu_custom_call.1}
  #allocation0 [shape = 'u32[]', space=smem, size = 0x4, offset = 0x4, fixed_abs, tag = 'smem constant byte address 0x4 - core index']
  #allocation1 [shape = 'u32[72,128]{1,0:T(1,128)}', space=vmem, size = 0x9000, scoped, tag = 'internal scratch']
  %s0 = inlined_call_operand.vmem [shape: f32[2,256], index: 0, kind: input, shape index: {}]
  %s1 = inlined_call_operand.vmem [shape: f32[32,2], index: 1, kind: input, shape index: {}]
  %s2 = inlined_call_operand.vmem [shape: f32[32,1], index: 2, kind: input, shape index: {}]
  %s3 = inlined_call_operand.vmem [shape: f32[2,32,32], index: 3, kind: input, shape index: {}]
  %s4 = inlined_call_operand.vmem [shape: f32[2,32,1], index: 4, kind: input, shape index: {}]
  %s5 = inlined_call_operand.vmem [shape: f32[3,32], index: 5, kind: input, shape index: {}]
  %s6 = inlined_call_operand.vmem [shape: f32[3,1], index: 6, kind: input, shape index: {}]
  %s7 = inlined_call_operand.hbm [shape: f32[3,256], index: 7, kind: output, shape index: {}]
  %s8 = sld [smem:[#allocation0]]
  $region38: #{tpu_custom_call.1} parent=0
    _
  %s10 = ssub.s32 1, %s8
  %s11 = scalar_select 0, %s10, %s8
  $region1: #{tpu_custom_call.1} parent=0
    #allocation2 [shape = 'u8[4096]{0}', space=vmem, size = 0x1000, scoped, tag = 'output window, operand 0, single buffered']
    #allocation3 [shape = 's32[1]{0}', space=sflag, size = 0x4, scoped, tag = 'scoped memory for tpu_custom_call.1']
    %12 = vsyncpa [#allocation3], 0
    // Predicated region
    $region2: #{tpu_custom_call.1} parent=1 // pred_check
      _
    $region3: #{tpu_custom_call.1} parent=1 // pred_check_branch
      %14 = sbr.rel (0) target = $region5
    $region4: #{tpu_custom_call.1} parent=1 // pred_region
      _
    $region5: #{tpu_custom_call.1} parent=1 // pred_fallthru
      _
    // Predicated region
    $region6: #{tpu_custom_call.1} parent=1 // pred_check
      _
    $region7: #{tpu_custom_call.1} parent=1 // pred_check_branch
      %16 = sbr.rel (0) target = $region9
    $region8: #{tpu_custom_call.1} parent=1 // pred_region
      _
    $region9: #{tpu_custom_call.1} parent=1 // pred_fallthru
      _
    // Predicated region
    $region10: #{tpu_custom_call.1} parent=1 // pred_check
      _
    $region11: #{tpu_custom_call.1} parent=1 // pred_check_branch
      %18 = sbr.rel (0) target = $region13
    $region12: #{tpu_custom_call.1} parent=1 // pred_region
      _
    $region13: #{tpu_custom_call.1} parent=1 // pred_fallthru
      _
    // Predicated region
    $region14: #{tpu_custom_call.1} parent=1 // pred_check
      _
    $region15: #{tpu_custom_call.1} parent=1 // pred_check_branch
      %20 = sbr.rel (0) target = $region17
    $region16: #{tpu_custom_call.1} parent=1 // pred_region
      _
    $region17: #{tpu_custom_call.1} parent=1 // pred_fallthru
      _
    // Predicated region
    $region18: #{tpu_custom_call.1} parent=1 // pred_check
      _
    $region19: #{tpu_custom_call.1} parent=1 // pred_check_branch
      %22 = sbr.rel (0) target = $region21
    $region20: #{tpu_custom_call.1} parent=1 // pred_region
      _
    $region21: #{tpu_custom_call.1} parent=1 // pred_fallthru
      _
    // Predicated region
    $region22: #{tpu_custom_call.1} parent=1 // pred_check
      _
    $region23: #{tpu_custom_call.1} parent=1 // pred_check_branch
      %24 = sbr.rel (0) target = $region25
    $region24: #{tpu_custom_call.1} parent=1 // pred_region
      _
    $region25: #{tpu_custom_call.1} parent=1 // pred_fallthru
      _
    // Predicated region
    $region26: #{tpu_custom_call.1} parent=1 // pred_check
      _
    $region27: #{tpu_custom_call.1} parent=1 // pred_check_branch
      %26 = sbr.rel (0) target = $region29
    $region28: #{tpu_custom_call.1} parent=1 // pred_region
      _
    $region29: #{tpu_custom_call.1} parent=1 // pred_fallthru
      _
    %v27 = vld [vmem:[%s0] sm:$0xf]
    %v28 = vld [vmem:[%s1] sm:$0xff]
    %v29 = vld [vmem:[%s1 + $0x8] sm:$0xff]
    %v30 = vld [vmem:[%s1 + $0x10] sm:$0xff]
    %v31 = vld [vmem:[%s1 + $0x18] sm:$0xff]
    %v32 = vld [vmem:[%s2] sm:$0xff]
    %v33 = vld [vmem:[%s2 + $0x8] sm:$0xff]
    %v34 = vld [vmem:[%s2 + $0x10] sm:$0xff]
    %v35 = vld [vmem:[%s2 + $0x18] sm:$0xff]
    %37 = vset.pattern.permute.xlu0 0
    %38 = vperm.xlu0 %37, %v32
    %v39 = vpop.permute.xlu0 %38
    %42 = vset.pattern.permute.xlu0 0
    %43 = vperm.xlu0 %42, %v33
    %v44 = vpop.permute.xlu0 %43
    %47 = vset.pattern.permute.xlu0 0
    %48 = vperm.xlu0 %47, %v34
    %v49 = vpop.permute.xlu0 %48
    %52 = vset.pattern.permute.xlu0 0
    %53 = vperm.xlu0 %52, %v35
    %v54 = vpop.permute.xlu0 %53
    %57 = vset.pattern.permute.xlu0 0
    %58 = vperm.xlu0 %57, %v28
    %v59 = vpop.permute.xlu0 %58
    %62 = vset.pattern.permute.xlu0 0
    %63 = vperm.xlu0 %62, %v29
    %v64 = vpop.permute.xlu0 %63
    %67 = vset.pattern.permute.xlu0 0
    %68 = vperm.xlu0 %67, %v30
    %v69 = vpop.permute.xlu0 %68
    %72 = vset.pattern.permute.xlu0 0
    %73 = vperm.xlu0 %72, %v31
    %v74 = vpop.permute.xlu0 %73
    %v77 = vperm.slane %v27, 0
    %v78 = vperm.slane %v27, 2
    %v81 = vperm.slane %v77, 0
    %v82 = vperm.slane %v78, 0
    %v83 = vmul.f32 %v59, %v81
    %v84 = vmul.f32 %v59, %v82
    %v85 = vmul.f32 %v64, %v81
    %v86 = vmul.f32 %v64, %v82
    %v87 = vmul.f32 %v69, %v81
    %v88 = vmul.f32 %v69, %v82
    %v89 = vmul.f32 %v74, %v81
    %v90 = vmul.f32 %v74, %v82
    %v91 = vadd.f32 %v39, %v83
    %v92 = vadd.f32 %v39, %v84
    %v93 = vadd.f32 %v44, %v85
    %v94 = vadd.f32 %v44, %v86
    %v95 = vadd.f32 %v49, %v87
    %v96 = vadd.f32 %v49, %v88
    %v97 = vadd.f32 %v54, %v89
    %v98 = vadd.f32 %v54, %v90
    %99 = vset.pattern.permute.xlu0 1
    %100 = vperm.xlu0 %99, %v28
    %v101 = vpop.permute.xlu0 %100
    %103 = vset.pattern.permute.xlu0 1
    %104 = vperm.xlu0 %103, %v29
    %v105 = vpop.permute.xlu0 %104
    %107 = vset.pattern.permute.xlu0 1
    %108 = vperm.xlu0 %107, %v30
    %v109 = vpop.permute.xlu0 %108
    %111 = vset.pattern.permute.xlu0 1
    %112 = vperm.xlu0 %111, %v31
    %v113 = vpop.permute.xlu0 %112
    %v115 = vperm.slane %v27, 1
    %v116 = vperm.slane %v27, 3
    %v119 = vperm.slane %v115, 1
    %v120 = vperm.slane %v116, 1
    %v121 = vmul.f32 %v101, %v119
    %v122 = vmul.f32 %v101, %v120
    %v123 = vmul.f32 %v105, %v119
    %v124 = vmul.f32 %v105, %v120
    %v125 = vmul.f32 %v109, %v119
    %v126 = vmul.f32 %v109, %v120
    %v127 = vmul.f32 %v113, %v119
    %v128 = vmul.f32 %v113, %v120
    %v129 = vadd.f32 %v91, %v121
    %v130 = vadd.f32 %v92, %v122
    %v131 = vadd.f32 %v93, %v123
    %v132 = vadd.f32 %v94, %v124
    %v133 = vadd.f32 %v95, %v125
    %v134 = vadd.f32 %v96, %v126
    %v135 = vadd.f32 %v97, %v127
    %v136 = vadd.f32 %v98, %v128
    %v137 = vtanh.pop %v129
    %v138 = vtanh.pop %v130
    %v139 = vtanh.pop %v131
    %v140 = vtanh.pop %v132
    %v141 = vtanh.pop %v133
    %v142 = vtanh.pop %v134
    %v143 = vtanh.pop %v135
    %v144 = vtanh.pop %v136
    %v145 = vld [vmem:[%s3] sm:$0xff]
    %v146 = vld [vmem:[%s3 + $0x8] sm:$0xff]
    %v147 = vld [vmem:[%s3 + $0x10] sm:$0xff]
    %v148 = vld [vmem:[%s3 + $0x18] sm:$0xff]
    %v149 = vld [vmem:[%s4] sm:$0xff]
    %v150 = vld [vmem:[%s4 + $0x8] sm:$0xff]
    %v151 = vld [vmem:[%s4 + $0x10] sm:$0xff]
    %v152 = vld [vmem:[%s4 + $0x18] sm:$0xff]
    %154 = vset.pattern.permute.xlu0 0
    %155 = vperm.xlu0 %154, %v149
    %v156 = vpop.permute.xlu0 %155
    %159 = vset.pattern.permute.xlu0 0
    %160 = vperm.xlu0 %159, %v150
    %v161 = vpop.permute.xlu0 %160
    %164 = vset.pattern.permute.xlu0 0
    %165 = vperm.xlu0 %164, %v151
    %v166 = vpop.permute.xlu0 %165
    %169 = vset.pattern.permute.xlu0 0
    %170 = vperm.xlu0 %169, %v152
    %v171 = vpop.permute.xlu0 %170
    %vm173 = vcmask 261120
    %v175 = vsel %vm173, %v145, 0
    %v178 = vsel %vm173, %v146, 0
    %v181 = vsel %vm173, %v147, 0
    %v184 = vsel %vm173, %v148, 0
    %186 = vmatpush.msra.mxu0 0.0
    %187 = vmatpush.msra.mxu0 0.0
    %188 = vmatpush.msra.mxu0 0.0
    %189 = vmatpush.msra.mxu0 0.0
    %190 = vmatpush.msra.mxu0 0.0
    %191 = vmatpush.msra.mxu0 0.0
    %192 = vmatpush.msra.mxu0 0.0
    %193 = vmatpush.msra.mxu0 0.0
    %194 = vmatpush.msra.mxu0 0.0
    %195 = vmatpush.msra.mxu0 0.0
    %196 = vmatpush.msra.mxu0 0.0
    %197 = vmatpush.msra.mxu0 0.0
    %198 = vmatpush.msra.mxu0 %v143
    %199 = vmatpush.msra.mxu0 %v141
    %200 = vmatpush.msra.mxu0 %v139
    %201 = vmatpush.msra.mxu0 %v137
    %202 = vmatmul.f32.gmra.mxu0 %v175
    %v203 = vpop.f32.mrf.mxu0
    %v204 = vadd.f32 %v156, %v203
    %205 = vmatmul.f32.gmra.mxu0 %v178
    %v206 = vpop.f32.mrf.mxu0
    %v207 = vadd.f32 %v161, %v206
    %208 = vmatmul.f32.gmra.mxu0 %v181
    %v209 = vpop.f32.mrf.mxu0
    %v210 = vadd.f32 %v166, %v209
    %211 = vmatmul.f32.gmra.mxu0 %v184
    %v212 = vpop.f32.mrf.mxu0
    %v213 = vadd.f32 %v171, %v212
    %214 = vdwg.mxu0
    %215 = vmatpush.msra.mxu0 0.0
    %216 = vmatpush.msra.mxu0 0.0
    %217 = vmatpush.msra.mxu0 0.0
    %218 = vmatpush.msra.mxu0 0.0
    %219 = vmatpush.msra.mxu0 0.0
    %220 = vmatpush.msra.mxu0 0.0
    %221 = vmatpush.msra.mxu0 0.0
    %222 = vmatpush.msra.mxu0 0.0
    %223 = vmatpush.msra.mxu0 0.0
    %224 = vmatpush.msra.mxu0 0.0
    %225 = vmatpush.msra.mxu0 0.0
    %226 = vmatpush.msra.mxu0 0.0
    %227 = vmatpush.msra.mxu0 %v144
    %228 = vmatpush.msra.mxu0 %v142
    %229 = vmatpush.msra.mxu0 %v140
    %230 = vmatpush.msra.mxu0 %v138
    %231 = vmatmul.f32.gmra.mxu0 %v175
    %v232 = vpop.f32.mrf.mxu0
    %v233 = vadd.f32 %v156, %v232
    %234 = vmatmul.f32.gmra.mxu0 %v178
    %v235 = vpop.f32.mrf.mxu0
    %v236 = vadd.f32 %v161, %v235
    %237 = vmatmul.f32.gmra.mxu0 %v181
    %v238 = vpop.f32.mrf.mxu0
    %v239 = vadd.f32 %v166, %v238
    %240 = vmatmul.f32.gmra.mxu0 %v184
    %v241 = vpop.f32.mrf.mxu0
    %v242 = vadd.f32 %v171, %v241
    %243 = vdwg.mxu0
    %v244 = vtanh.pop %v204
    %v245 = vtanh.pop %v233
    %v246 = vtanh.pop %v207
    %v247 = vtanh.pop %v236
    %v248 = vtanh.pop %v210
    %v249 = vtanh.pop %v239
    %v250 = vtanh.pop %v213
    %v251 = vtanh.pop %v242
    %s252 = scalar_lea.vmem %s3, 32
    %v253 = vld [vmem:[%s252] sm:$0xff]
    %v254 = vld [vmem:[%s252 + $0x8] sm:$0xff]
    %v255 = vld [vmem:[%s252 + $0x10] sm:$0xff]
    %v256 = vld [vmem:[%s252 + $0x18] sm:$0xff]
    %s257 = scalar_lea.vmem %s4, 32
    %v258 = vld [vmem:[%s257] sm:$0xff]
    %v259 = vld [vmem:[%s257 + $0x8] sm:$0xff]
    %v260 = vld [vmem:[%s257 + $0x10] sm:$0xff]
    %v261 = vld [vmem:[%s257 + $0x18] sm:$0xff]
    %263 = vset.pattern.permute.xlu0 0
    %264 = vperm.xlu0 %263, %v258
    %v265 = vpop.permute.xlu0 %264
    %268 = vset.pattern.permute.xlu0 0
    %269 = vperm.xlu0 %268, %v259
    %v270 = vpop.permute.xlu0 %269
    %273 = vset.pattern.permute.xlu0 0
    %274 = vperm.xlu0 %273, %v260
    %v275 = vpop.permute.xlu0 %274
    %278 = vset.pattern.permute.xlu0 0
    %279 = vperm.xlu0 %278, %v261
    %v280 = vpop.permute.xlu0 %279
    %v283 = vsel %vm173, %v253, 0
    %v286 = vsel %vm173, %v254, 0
    %v289 = vsel %vm173, %v255, 0
    %v292 = vsel %vm173, %v256, 0
    %294 = vmatpush.msra.mxu0 0.0
    %295 = vmatpush.msra.mxu0 0.0
    %296 = vmatpush.msra.mxu0 0.0
    %297 = vmatpush.msra.mxu0 0.0
    %298 = vmatpush.msra.mxu0 0.0
    %299 = vmatpush.msra.mxu0 0.0
    %300 = vmatpush.msra.mxu0 0.0
    %301 = vmatpush.msra.mxu0 0.0
    %302 = vmatpush.msra.mxu0 0.0
    %303 = vmatpush.msra.mxu0 0.0
    %304 = vmatpush.msra.mxu0 0.0
    %305 = vmatpush.msra.mxu0 0.0
    %306 = vmatpush.msra.mxu0 %v250
    %307 = vmatpush.msra.mxu0 %v248
    %308 = vmatpush.msra.mxu0 %v246
    %309 = vmatpush.msra.mxu0 %v244
    %310 = vmatmul.f32.gmra.mxu0 %v283
    %v311 = vpop.f32.mrf.mxu0
    %v312 = vadd.f32 %v265, %v311
    %313 = vmatmul.f32.gmra.mxu0 %v286
    %v314 = vpop.f32.mrf.mxu0
    %v315 = vadd.f32 %v270, %v314
    %316 = vmatmul.f32.gmra.mxu0 %v289
    %v317 = vpop.f32.mrf.mxu0
    %v318 = vadd.f32 %v275, %v317
    %319 = vmatmul.f32.gmra.mxu0 %v292
    %v320 = vpop.f32.mrf.mxu0
    %v321 = vadd.f32 %v280, %v320
    %322 = vdwg.mxu0
    %323 = vmatpush.msra.mxu0 0.0
    %324 = vmatpush.msra.mxu0 0.0
    %325 = vmatpush.msra.mxu0 0.0
    %326 = vmatpush.msra.mxu0 0.0
    %327 = vmatpush.msra.mxu0 0.0
    %328 = vmatpush.msra.mxu0 0.0
    %329 = vmatpush.msra.mxu0 0.0
    %330 = vmatpush.msra.mxu0 0.0
    %331 = vmatpush.msra.mxu0 0.0
    %332 = vmatpush.msra.mxu0 0.0
    %333 = vmatpush.msra.mxu0 0.0
    %334 = vmatpush.msra.mxu0 0.0
    %335 = vmatpush.msra.mxu0 %v251
    %336 = vmatpush.msra.mxu0 %v249
    %337 = vmatpush.msra.mxu0 %v247
    %338 = vmatpush.msra.mxu0 %v245
    %339 = vmatmul.f32.gmra.mxu0 %v283
    %v340 = vpop.f32.mrf.mxu0
    %v341 = vadd.f32 %v265, %v340
    %342 = vmatmul.f32.gmra.mxu0 %v286
    %v343 = vpop.f32.mrf.mxu0
    %v344 = vadd.f32 %v270, %v343
    %345 = vmatmul.f32.gmra.mxu0 %v289
    %v346 = vpop.f32.mrf.mxu0
    %v347 = vadd.f32 %v275, %v346
    %348 = vmatmul.f32.gmra.mxu0 %v292
    %v349 = vpop.f32.mrf.mxu0
    %v350 = vadd.f32 %v280, %v349
    %351 = vdwg.mxu0
    %v352 = vtanh.pop %v312
    %v353 = vtanh.pop %v341
    %v354 = vtanh.pop %v315
    %v355 = vtanh.pop %v344
    %v356 = vtanh.pop %v318
    %v357 = vtanh.pop %v347
    %v358 = vtanh.pop %v321
    %v359 = vtanh.pop %v350
    %v360 = vld [vmem:[%s5] sm:$0x7]
    %v361 = vld [vmem:[%s6] sm:$0x7]
    %363 = vset.pattern.permute.xlu0 0
    %364 = vperm.xlu0 %363, %v361
    %v365 = vpop.permute.xlu0 %364
    %v368 = vsel %vm173, %v360, 0
    %370 = vmatpush.msra.mxu0 0.0
    %371 = vmatpush.msra.mxu0 0.0
    %372 = vmatpush.msra.mxu0 0.0
    %373 = vmatpush.msra.mxu0 0.0
    %374 = vmatpush.msra.mxu0 0.0
    %375 = vmatpush.msra.mxu0 0.0
    %376 = vmatpush.msra.mxu0 0.0
    %377 = vmatpush.msra.mxu0 0.0
    %378 = vmatpush.msra.mxu0 0.0
    %379 = vmatpush.msra.mxu0 0.0
    %380 = vmatpush.msra.mxu0 0.0
    %381 = vmatpush.msra.mxu0 0.0
    %382 = vmatpush.msra.mxu0 %v358
    %383 = vmatpush.msra.mxu0 %v356
    %384 = vmatpush.msra.mxu0 %v354
    %385 = vmatpush.msra.mxu0 %v352
    %386 = vmatmul.f32.gmra.mxu0 %v368
    %v387 = vpop.f32.mrf.mxu0
    %v388 = vadd.f32 %v365, %v387
    %389 = vdwg.mxu0
    %390 = vmatpush.msra.mxu0 0.0
    %391 = vmatpush.msra.mxu0 0.0
    %392 = vmatpush.msra.mxu0 0.0
    %393 = vmatpush.msra.mxu0 0.0
    %394 = vmatpush.msra.mxu0 0.0
    %395 = vmatpush.msra.mxu0 0.0
    %396 = vmatpush.msra.mxu0 0.0
    %397 = vmatpush.msra.mxu0 0.0
    %398 = vmatpush.msra.mxu0 0.0
    %399 = vmatpush.msra.mxu0 0.0
    %400 = vmatpush.msra.mxu0 0.0
    %401 = vmatpush.msra.mxu0 0.0
    %402 = vmatpush.msra.mxu0 %v359
    %403 = vmatpush.msra.mxu0 %v357
    %404 = vmatpush.msra.mxu0 %v355
    %405 = vmatpush.msra.mxu0 %v353
    %406 = vmatmul.f32.gmra.mxu0 %v368
    %v407 = vpop.f32.mrf.mxu0
    %v408 = vadd.f32 %v365, %v407
    %409 = vdwg.mxu0
    %v412 = vrot.slane %v408, 4
    %vm413 = vcmask 1043456
    %v414 = vsel %vm413, %v388, %v412
    %416 = vst [vmem:[#allocation2] sm:$0x77] %v414
    // Predicated region
    $region30: #{tpu_custom_call.1} parent=1 // pred_check
      _
    $region31: #{tpu_custom_call.1} parent=1 // pred_check_branch
      %418 = sbr.rel (0) target = $region33
    $region32: #{tpu_custom_call.1} parent=1 // pred_region
      %420 = vsyncadd [#allocation3], 0
      %s422 = sshll.u32 [#allocation2], 4
      %s423 = int_to_ptr.vmem [resolvable:$true] %s422
      %s424 = sshll.u32 %s7, 4
      %s425 = int_to_ptr.hbm [resolvable:$true] %s424
      %427 = dma.vmem_to_hbm [thread:$0]  %s423, 128, %s425, [#allocation3]
    $region33: #{tpu_custom_call.1} parent=1 // pred_fallthru
      _
    // Predicated region
    $region34: #{tpu_custom_call.1} parent=1 // pred_check
      _
    $region35: #{tpu_custom_call.1} parent=1 // pred_check_branch
      %429 = sbr.rel (0) target = $region37
    $region36: #{tpu_custom_call.1} parent=1 // pred_region
      %431 = dma.done [#allocation3], 128
    $region37: #{tpu_custom_call.1} parent=1 // pred_fallthru
      _
    %432 = vsyncpa [#allocation3], 1

</llo_original>
